<compile_context>
chip_gen: v6e
topology: v6e:2x2x1
jax: 0.10.0
libtpu: 0.0.40
codegen_flags: <defaults>
</compile_context>

<pallas_src>
import functools

import jax
import jax.numpy as jnp
from jax import lax
from jax.experimental import pallas as pl
from jax.experimental.pallas import tpu as pltpu

LAYER_NORM_EPS = 1e-5  # config.layer_norm_eps (Roberta default)


def _round_up(x, m):
    return (x + m - 1) // m * m


def _vmem_cap_bytes():
    """Physical per-core VMEM (64 MiB on v7x, 128 MiB on v5e/v6e)."""
    try:
        cap = int(getattr(pltpu.get_tpu_info(), "vmem_capacity_bytes", 0))
        if cap > 0:
            return cap
    except Exception:
        pass
    return 128 << 20


def _pick_tile(n, tm_pref):
    """Row tile: prefer an exact divisor of n; split tiny inputs in two."""
    tm_pref = max(8, _round_up(tm_pref, 8))
    if n <= tm_pref:
        # >=2 tiles so ("parallel",) can shard across v7x's two TensorCores.
        return max(8, _round_up(-(-n // 2), 8))
    for t in range(tm_pref, 63, -8):
        if n % t == 0:
            return t            # Np == N -> no padded rows, pure-reshape return
    return tm_pref              # fall back to padding the row count


def _const_block_spec(shape, index_map):
    """Constant-index input: single-buffered (its block never changes)."""
    try:
        return pl.BlockSpec(shape, index_map, pipeline_mode=pl.Buffered(1))
    except Exception:           # older BlockSpec without pipeline_mode
        return pl.BlockSpec(shape, index_map)


# ---------------------------------------------------------------------------
# shared in-kernel helpers
# ---------------------------------------------------------------------------
def _token_type_emb(tts, tt_tab_ref, tm, hp):
    """Token-type lookup as a VPU select chain (type_vocab_size is tiny)."""
    t_count = tt_tab_ref.shape[0]
    emb = jnp.broadcast_to(tt_tab_ref[0:1, :], (tm, hp))
    for t in range(1, t_count):
        emb = jnp.where(tts == t, tt_tab_ref[t:t + 1, :], emb)
    return emb


def _layer_norm(x, gamma, beta, h_real, h_pad, eps):
    """Two-pass LayerNorm over the real hidden dim; padded cols masked out."""
    inv_h = jnp.float32(1.0 / h_real)
    mean = jnp.sum(x, axis=-1, keepdims=True) * inv_h     # padded cols are 0
    xc = x - mean
    if h_pad != h_real:
        col = lax.broadcasted_iota(jnp.int32, x.shape, 1)
        xc = jnp.where(col < h_real, xc, 0.0)
    var = jnp.sum(xc * xc, axis=-1, keepdims=True) * inv_h
    inv = lax.rsqrt(var + jnp.float32(eps))
    # Padded output columns: 0 * inv * 0 + 0 == 0 (gamma/beta zero-padded).
    return xc * inv * gamma + beta


# ---------------------------------------------------------------------------
# Path A: one-hot MXU gather (word table resident in VMEM, small vocab)
# ---------------------------------------------------------------------------
def _onehot_kernel(ids_ref, tt_ref, word_tab_ref, tt_tab_ref, gamma_ref,
                   beta_ref, out_ref, *, h_real, eps):
    tm = ids_ref.shape[0]
    vp = word_tab_ref.shape[0]
    hp = out_ref.shape[1]

    ids = ids_ref[...]                                   # (tm, 1) int32
    # One-hot gather on the MXU; 0/1 is exact in bf16. Out-of-range ids give
    # an all-zero row -> zero embedding (caller keeps padding_idx row zeroed).
    onehot = (lax.broadcasted_iota(jnp.int32, (tm, vp), 1) == ids
              ).astype(jnp.bfloat16)
    x = jnp.dot(onehot, word_tab_ref[...], preferred_element_type=jnp.float32)

    x = x + _token_type_emb(tt_ref[...], tt_tab_ref, tm, hp)
    out_ref[...] = _layer_norm(x, gamma_ref[...], beta_ref[...],
                               h_real, hp, eps).astype(out_ref.dtype)
    # Dropout: identity (eval mode).


# ---------------------------------------------------------------------------
# Path B: scalar-prefetch DMA row gather (word table stays in HBM, big vocab)
# ---------------------------------------------------------------------------
def _gather_kernel(ids_sref, tt_ref, word_hbm_ref, tt_tab_ref, gamma_ref,
                   beta_ref, out_ref, gbuf, sem, *, h_real, eps):
    tm, hp = out_ref.shape
    base = pl.program_id(0) * tm

    # Start all row DMAs for this tile, then wait for all of them
    # (identical-size copies sharing one DMA semaphore).
    @pl.loop(0, tm)
    def _(r):
        row = ids_sref[base + r]
        pltpu.make_async_copy(word_hbm_ref.at[row], gbuf.at[r], sem).start()

    @pl.loop(0, tm)
    def _(r):
        pltpu.make_async_copy(word_hbm_ref.at[0], gbuf.at[0], sem).wait()

    x = gbuf[...].astype(jnp.float32)                    # exact gather
    x = x + _token_type_emb(tt_ref[...], tt_tab_ref, tm, hp)
    out_ref[...] = _layer_norm(x, gamma_ref[...], beta_ref[...],
                               h_real, hp, eps).astype(out_ref.dtype)
    # Dropout: identity (eval mode).


# ---------------------------------------------------------------------------
# Wrapper
# ---------------------------------------------------------------------------
def roberta_ngram_embeddings(input_ids, token_type_ids, word_table, tt_table,
                             gamma, beta, *, tm=512, eps=LAYER_NORM_EPS,
                             out_dtype=jnp.float32, gather=None):
    """tm: desired row tile; 512-1024 is a good default on v5e/v6e/v7x.

    gather=None  -> auto-select (one-hot MXU path for small vocabs,
                    HBM DMA row gather otherwise).
    """
    B, S = input_ids.shape
    V, H = word_table.shape
    T = tt_table.shape[0]
    N = B * S

    if token_type_ids is None:
        token_type_ids = jnp.zeros_like(input_ids)

    tm_eff = _pick_tile(N, tm)
    Np = _round_up(N, tm_eff)
    Hp = _round_up(H, 128)                   # lane-dense output stores
    grid = (Np // tm_eff,)

    ids = input_ids.reshape(N).astype(jnp.int32)
    tts = token_type_ids.reshape(N).astype(jnp.int32)
    if Np != N:
        ids = jnp.pad(ids, (0, Np - N))      # padded rows sliced off below
        tts = jnp.pad(tts, (0, Np - N))
    tts2 = tts.reshape(Np, 1)

    tt_tab = tt_table.astype(jnp.float32)
    gamma_p = gamma.reshape(-1).astype(jnp.float32)
    beta_p = beta.reshape(-1).astype(jnp.float32)
    if Hp != H:
        tt_tab = jnp.pad(tt_tab, ((0, 0), (0, Hp - H)))
        gamma_p = jnp.pad(gamma_p, (0, Hp - H))
        beta_p = jnp.pad(beta_p, (0, Hp - H))
    gamma2 = gamma_p.reshape(1, Hp)
    beta2 = beta_p.reshape(1, Hp)

    cap = _vmem_cap_bytes()
    ceiling = int(cap * 0.78)                # ~50 MiB v7x, ~100 MiB v5e/v6e
    obytes = jnp.dtype(out_dtype).itemsize

    Vp = _round_up(V, 256)                   # full-width MXU contraction
    onehot_vmem = Vp * Hp * 2 + tm_eff * Vp * 2
    if gather is None:
        gather = onehot_vmem > (12 << 20)    # big vocab -> DMA row gather

    semantics = ("parallel",)                # shards the grid across TCs (v7x)

    if not gather:
        # ---- Path A: resident bf16 table + one-hot MXU gather -------------
        word_tab = word_table.astype(jnp.bfloat16)
        if Hp != H:
            word_tab = jnp.pad(word_tab, ((0, 0), (0, Hp - H)))
        if Vp != V:
            word_tab = jnp.pad(word_tab, ((0, Vp - V), (0, 0)))
        ids2 = ids.reshape(Np, 1)

        need = (2 * 2 * tm_eff * 4                    # ids + tts tiles (2-buf)
                + 2 * tm_eff * Hp * obytes            # out tile (2-buf)
                + Vp * Hp * 2                         # word table (1-buf)
                + T * Hp * 4 + 2 * Hp * 4             # tt table / gamma / beta
                + tm_eff * Vp * 2                     # one-hot
                + 6 * tm_eff * Hp * 4                 # live intermediates
                + (8 << 20))                          # headroom
        vmem_limit = max(min(need, ceiling), min(32 << 20, ceiling))

        kernel = functools.partial(_onehot_kernel, h_real=H, eps=eps)
        out = pl.pallas_call(
            kernel,
            out_shape=jax.ShapeDtypeStruct((Np, Hp), out_dtype),
            grid_spec=pltpu.PrefetchScalarGridSpec(
                num_scalar_prefetch=0,
                grid=grid,
                in_specs=[
                    pl.BlockSpec((tm_eff, 1), lambda i: (i, 0)),   # ids tile
                    pl.BlockSpec((tm_eff, 1), lambda i: (i, 0)),   # tt ids tile
                    _const_block_spec((Vp, Hp), lambda i: (0, 0)), # word table
                    _const_block_spec((T, Hp), lambda i: (0, 0)),  # type table
                    _const_block_spec((1, Hp), lambda i: (0, 0)),  # gamma
                    _const_block_spec((1, Hp), lambda i: (0, 0)),  # beta
                ],
                out_specs=pl.BlockSpec((tm_eff, Hp), lambda i: (i, 0)),
            ),
            compiler_params=pltpu.CompilerParams(
                dimension_semantics=semantics,
                vmem_limit_bytes=int(vmem_limit),
            ),
        )(ids2, tts2, word_tab, tt_tab, gamma2, beta2)
    else:
        # ---- Path B: HBM table + scalar-prefetch DMA row gather -----------
        wt = word_table
        if Hp != H:
            # TODO(synk): for a huge vocab this column pad is a full HBM copy;
            # real Roberta hidden sizes (768/1024) already satisfy Hp == H.
            wt = jnp.pad(wt, ((0, 0), (0, Hp - H)))
        wbytes = jnp.dtype(wt.dtype).itemsize

        need = (2 * 2 * tm_eff * 4                    # tts tile (2-buf)
                + 2 * tm_eff * Hp * obytes            # out tile (2-buf)
                + tm_eff * Hp * wbytes                # gather buffer
                + T * Hp * 4 + 2 * Hp * 4             # tt table / gamma / beta
                + 6 * tm_eff * Hp * 4                 # live intermediates
                + (8 << 20))                          # headroom
        vmem_limit = max(min(need, ceiling), min(32 << 20, ceiling))

        kernel = functools.partial(_gather_kernel, h_real=H, eps=eps)
        out = pl.pallas_call(
            kernel,
            out_shape=jax.ShapeDtypeStruct((Np, Hp), out_dtype),
            grid_spec=pltpu.PrefetchScalarGridSpec(
                num_scalar_prefetch=1,                # ids -> SMEM
                grid=grid,
                in_specs=[
                    pl.BlockSpec((tm_eff, 1), lambda i, ids_s: (i, 0)),  # tt ids
                    pl.BlockSpec(memory_space=pl.ANY),                   # word table (HBM)
                    _const_block_spec((T, Hp), lambda i, ids_s: (0, 0)),
                    _const_block_spec((1, Hp), lambda i, ids_s: (0, 0)),
                    _const_block_spec((1, Hp), lambda i, ids_s: (0, 0)),
                ],
                out_specs=pl.BlockSpec((tm_eff, Hp), lambda i, ids_s: (i, 0)),
                scratch_shapes=[
                    pltpu.VMEM((tm_eff, Hp), wt.dtype),   # row-gather buffer
                    pltpu.SemaphoreType.DMA(()),          # shared DMA sem
                ],
            ),
            compiler_params=pltpu.CompilerParams(
                dimension_semantics=semantics,
                vmem_limit_bytes=int(vmem_limit),
            ),
        )(ids, tts2, wt, tt_tab, gamma2, beta2)

    if Np == N and Hp == H:
        return out.reshape(B, S, H)          # fast path: no epilogue copy
    return out[:N, :H].reshape(B, S, H)


def _reference(input_ids, token_type_ids, word_table, tt_table, gamma, beta,
               eps=LAYER_NORM_EPS):
    w = word_table[input_ids]
    t = tt_table[token_type_ids]
    x = w + t
    mean = jnp.mean(x, axis=-1, keepdims=True)
    var = jnp.mean((x - mean) ** 2, axis=-1, keepdims=True)
    xn = (x - mean) * lax.rsqrt(var + eps)
    return xn * gamma + beta


if __name__ == "__main__":
    # Synthetic config (small shapes consistent with the module).
    NGRAM_SIZE = 64        # config.Ngram_size
    HIDDEN = 32            # config.hidden_size
    TYPE_VOCAB = 2         # config.type_vocab_size
    PAD_TOKEN_ID = 1       # config.pad_token_id
    B, S = 2, 8

    key = jax.random.PRNGKey(0)
    k1, k2, k3, k4 = jax.random.split(key, 4)

    word_table = 0.02 * jax.random.normal(k1, (NGRAM_SIZE, HIDDEN), jnp.float32)
    # padding_idx semantics: pad row is all-zeros (caller-enforced, as in
    # nn.Embedding(padding_idx=...) weights).
    word_table = word_table.at[PAD_TOKEN_ID].set(0.0)
    tt_table = 0.02 * jax.random.normal(k2, (TYPE_VOCAB, HIDDEN), jnp.float32)
    gamma = jnp.ones((HIDDEN,), jnp.float32)
    beta = jnp.zeros((HIDDEN,), jnp.float32)

    input_ids = jax.random.randint(k3, (B, S), 0, NGRAM_SIZE, dtype=jnp.int32)
    token_type_ids = jax.random.randint(k4, (B, S), 0, TYPE_VOCAB, dtype=jnp.int32)

    ref_exact = _reference(input_ids, token_type_ids, word_table, tt_table,
                           gamma.reshape(1, 1, -1), beta.reshape(1, 1, -1))

    # Path A: one-hot MXU gather (word table is bf16-rounded inside the kernel,
    # one-hot select itself is exact) -> compare vs bf16-rounded-table reference.
    out_a = roberta_ngram_embeddings(input_ids, token_type_ids, word_table,
                                     tt_table, gamma, beta, gather=False)
    out_a = jax.block_until_ready(out_a)
    wt_bf16 = word_table.astype(jnp.bfloat16).astype(jnp.float32)
    ref_bf16 = _reference(input_ids, token_type_ids, wt_bf16, tt_table,
                          gamma.reshape(1, 1, -1), beta.reshape(1, 1, -1))
    assert out_a.shape == (B, S, HIDDEN)
    assert jnp.allclose(out_a, ref_bf16, atol=1e-4, rtol=1e-4), float(
        jnp.max(jnp.abs(out_a - ref_bf16)))

    # Path B: HBM-resident table + scalar-prefetch DMA row gather (exact f32).
    out_b = roberta_ngram_embeddings(input_ids, token_type_ids, word_table,
                                     tt_table, gamma, beta, gather=True)
    out_b = jax.block_until_ready(out_b)
    assert out_b.shape == (B, S, HIDDEN)
    assert jnp.allclose(out_b, ref_exact, atol=1e-4, rtol=1e-4), float(
        jnp.max(jnp.abs(out_b - ref_exact)))

    print("KERNEL_OK")
</pallas_src>

<mosaic_0001>
module attributes {stable_mosaic.version = 11 : i64} {
  func.func @_onehot_kernel(%arg0: i32, %arg1: memref<8x1xi32, #tpu.memory_space<vmem>>, %arg2: memref<8x1xi32, #tpu.memory_space<vmem>>, %arg3: memref<256x128xbf16, #tpu.memory_space<vmem>>, %arg4: memref<2x128xf32, #tpu.memory_space<vmem>>, %arg5: memref<1x128xf32, #tpu.memory_space<vmem>>, %arg6: memref<1x128xf32, #tpu.memory_space<vmem>>, %arg7: memref<8x128xf32, #tpu.memory_space<vmem>>) attributes {dimension_semantics = [#tpu.dimension_semantics<parallel>], iteration_bounds = array<i64: 2>, scalar_prefetch = 0 : i64, scratch_operands = 0 : i64, tpu.core_type = #tpu.core_type<tc>, window_params = [{transform_indices = @transform_0, window_bounds = array<i64: 8, 1>}, {transform_indices = @transform_1, window_bounds = array<i64: 8, 1>}, {pipeline_mode = #tpu.pipeline_mode<synchronous>, transform_indices = @transform_2, window_bounds = array<i64: 256, 128>}, {pipeline_mode = #tpu.pipeline_mode<synchronous>, transform_indices = @transform_3, window_bounds = array<i64: 2, 128>}, {pipeline_mode = #tpu.pipeline_mode<synchronous>, transform_indices = @transform_4, window_bounds = array<i64: 1, 128>}, {pipeline_mode = #tpu.pipeline_mode<synchronous>, transform_indices = @transform_5, window_bounds = array<i64: 1, 128>}, {transform_indices = @transform_6, window_bounds = array<i64: 8, 128>}]} {
    %c0 = arith.constant 0 : index
    %c0_0 = arith.constant 0 : index
    %0 = vector.load %arg1[%c0, %c0_0] : memref<8x1xi32, #tpu.memory_space<vmem>>, vector<8x1xi32>
    %1 = tpu.iota {dimensions = array<i32: 1>} : vector<8x256xi32>
    %2 = vector.broadcast %0 : vector<8x1xi32> to vector<8x256xi32>
    %3 = arith.cmpi eq, %1, %2 : vector<8x256xi32>
    %4 = arith.extui %3 : vector<8x256xi1> to vector<8x256xi32>
    %5 = arith.sitofp %4 : vector<8x256xi32> to vector<8x256xf32>
    %6 = arith.truncf %5 : vector<8x256xf32> to vector<8x256xbf16>
    %c0_1 = arith.constant 0 : index
    %c0_2 = arith.constant 0 : index
    %7 = vector.load %arg3[%c0_1, %c0_2] : memref<256x128xbf16, #tpu.memory_space<vmem>>, vector<256x128xbf16>
    %cst = arith.constant dense<0.000000e+00> : vector<8x128xf32>
    %8 = tpu.matmul %6, %7, %cst {dimension_numbers = #tpu.dot_dimension_numbers<[1], [0], [0], [1], [0, 0, 1, 1], [], []>} : vector<8x256xbf16>, vector<256x128xbf16>, vector<8x128xf32> -> vector<8x128xf32>
    %c0_3 = arith.constant 0 : index
    %c0_4 = arith.constant 0 : index
    %9 = vector.load %arg2[%c0_3, %c0_4] : memref<8x1xi32, #tpu.memory_space<vmem>>, vector<8x1xi32>
    %c0_5 = arith.constant 0 : index
    %c0_6 = arith.constant 0 : index
    %10 = vector.load %arg4[%c0_5, %c0_6] : memref<2x128xf32, #tpu.memory_space<vmem>>, vector<1x128xf32>
    %11 = vector.shape_cast %10 : vector<1x128xf32> to vector<1x128xf32>
    %12 = vector.broadcast %11 : vector<1x128xf32> to vector<8x128xf32>
    %c1_i32 = arith.constant 1 : i32
    %13 = vector.broadcast %c1_i32 : i32 to vector<8x1xi32>
    %14 = arith.cmpi eq, %9, %13 : vector<8x1xi32>
    %c1 = arith.constant 1 : index
    %c0_7 = arith.constant 0 : index
    %15 = vector.load %arg4[%c1, %c0_7] : memref<2x128xf32, #tpu.memory_space<vmem>>, vector<1x128xf32>
    %16 = vector.shape_cast %14 : vector<8x1xi1> to vector<8x1xi1>
    %17 = vector.broadcast %16 : vector<8x1xi1> to vector<8x128xi1>
    %18 = vector.shape_cast %15 : vector<1x128xf32> to vector<1x128xf32>
    %19 = vector.broadcast %18 : vector<1x128xf32> to vector<8x128xf32>
    %20 = arith.select %17, %19, %12 : vector<8x128xi1>, vector<8x128xf32>
    %21 = arith.addf %8, %20 : vector<8x128xf32>
    %c0_8 = arith.constant 0 : index
    %c0_9 = arith.constant 0 : index
    %22 = vector.load %arg5[%c0_8, %c0_9] : memref<1x128xf32, #tpu.memory_space<vmem>>, vector<1x128xf32>
    %c0_10 = arith.constant 0 : index
    %c0_11 = arith.constant 0 : index
    %23 = vector.load %arg6[%c0_10, %c0_11] : memref<1x128xf32, #tpu.memory_space<vmem>>, vector<1x128xf32>
    %cst_12 = arith.constant dense<0.000000e+00> : vector<8xf32>
    %24 = vector.multi_reduction <add>, %21, %cst_12 [1] : vector<8x128xf32> to vector<8xf32>
    %25 = vector.shape_cast %24 : vector<8xf32> to vector<8x1xf32>
    %cst_13 = arith.constant 3.125000e-02 : f32
    %26 = vector.broadcast %cst_13 : f32 to vector<8x1xf32>
    %27 = arith.mulf %25, %26 : vector<8x1xf32>
    %28 = vector.broadcast %27 : vector<8x1xf32> to vector<8x128xf32>
    %29 = arith.subf %21, %28 : vector<8x128xf32>
    %30 = tpu.iota {dimensions = array<i32: 1>} : vector<8x128xi32>
    %c32_i32 = arith.constant 32 : i32
    %31 = vector.broadcast %c32_i32 : i32 to vector<8x128xi32>
    %32 = arith.cmpi slt, %30, %31 : vector<8x128xi32>
    %cst_14 = arith.constant 0.000000e+00 : f32
    %33 = vector.broadcast %cst_14 : f32 to vector<8x128xf32>
    %34 = arith.select %32, %29, %33 : vector<8x128xi1>, vector<8x128xf32>
    %35 = arith.mulf %34, %34 : vector<8x128xf32>
    %cst_15 = arith.constant dense<0.000000e+00> : vector<8xf32>
    %36 = vector.multi_reduction <add>, %35, %cst_15 [1] : vector<8x128xf32> to vector<8xf32>
    %37 = vector.shape_cast %36 : vector<8xf32> to vector<8x1xf32>
    %cst_16 = arith.constant 3.125000e-02 : f32
    %38 = vector.broadcast %cst_16 : f32 to vector<8x1xf32>
    %39 = arith.mulf %37, %38 : vector<8x1xf32>
    %cst_17 = arith.constant 9.99999974E-6 : f32
    %40 = vector.broadcast %cst_17 : f32 to vector<8x1xf32>
    %41 = arith.addf %39, %40 : vector<8x1xf32>
    %42 = math.rsqrt %41 : vector<8x1xf32>
    %43 = vector.broadcast %42 : vector<8x1xf32> to vector<8x128xf32>
    %44 = arith.mulf %34, %43 : vector<8x128xf32>
    %45 = vector.broadcast %22 : vector<1x128xf32> to vector<8x128xf32>
    %46 = arith.mulf %44, %45 : vector<8x128xf32>
    %47 = vector.broadcast %23 : vector<1x128xf32> to vector<8x128xf32>
    %48 = arith.addf %46, %47 : vector<8x128xf32>
    %c0_18 = arith.constant 0 : index
    %c0_19 = arith.constant 0 : index
    %49 = vector.load %arg7[%c0_18, %c0_19] : memref<8x128xf32, #tpu.memory_space<vmem>>, vector<8x128xf32>
    tpu.vector_store %arg7[%c0_18, %c0_19], %48 {strides = array<i32>} : memref<8x128xf32, #tpu.memory_space<vmem>>, vector<8x128xf32>,
    return
  }
  func.func @transform_0(%arg0: i32) -> (i32, i32) {
    %c0_i32 = arith.constant 0 : i32
    %c0_i32_0 = arith.constant 0 : i32
    return %arg0, %c0_i32 : i32, i32
  }
  func.func @transform_1(%arg0: i32) -> (i32, i32) {
    %c0_i32 = arith.constant 0 : i32
    %c0_i32_0 = arith.constant 0 : i32
    return %arg0, %c0_i32 : i32, i32
  }
  func.func @transform_2(%arg0: i32) -> (i32, i32) {
    %c0_i32 = arith.constant 0 : i32
    %c0_i32_0 = arith.constant 0 : i32
    %c0_i32_1 = arith.constant 0 : i32
    return %c0_i32, %c0_i32_0 : i32, i32
  }
  func.func @transform_3(%arg0: i32) -> (i32, i32) {
    %c0_i32 = arith.constant 0 : i32
    %c0_i32_0 = arith.constant 0 : i32
    %c0_i32_1 = arith.constant 0 : i32
    return %c0_i32, %c0_i32_0 : i32, i32
  }
  func.func @transform_4(%arg0: i32) -> (i32, i32) {
    %c0_i32 = arith.constant 0 : i32
    %c0_i32_0 = arith.constant 0 : i32
    %c0_i32_1 = arith.constant 0 : i32
    return %c0_i32, %c0_i32_0 : i32, i32
  }
  func.func @transform_5(%arg0: i32) -> (i32, i32) {
    %c0_i32 = arith.constant 0 : i32
    %c0_i32_0 = arith.constant 0 : i32
    %c0_i32_1 = arith.constant 0 : i32
    return %c0_i32, %c0_i32_0 : i32, i32
  }
  func.func @transform_6(%arg0: i32) -> (i32, i32) {
    %c0_i32 = arith.constant 0 : i32
    %c0_i32_0 = arith.constant 0 : i32
    return %arg0, %c0_i32 : i32, i32
  }
}

</mosaic_0001>

<llo_original>
// kernel: tpu_custom_call.1
$region0: #{tpu_custom_call.1}
  #allocation0 [shape = 'u32[]', space=smem, size = 0x4, offset = 0x4, fixed_abs, tag = 'smem constant byte address 0x4 - core index']
  #allocation1 [shape = 'u32[144,128]{1,0:T(1,128)}', space=vmem, size = 0x12000, scoped, tag = 'internal scratch']
  %s0 = inlined_call_operand.vmem [shape: s32[16,1], index: 0, kind: input, shape index: {}]
  %s1 = inlined_call_operand.vmem [shape: s32[16,1], index: 1, kind: input, shape index: {}]
  %s2 = inlined_call_operand.hbm [shape: bf16[256,128], index: 2, kind: input, shape index: {}]
  %s3 = inlined_call_operand.vmem [shape: f32[2,128], index: 3, kind: input, shape index: {}]
  %s4 = inlined_call_operand.vmem [shape: f32[1,128], index: 4, kind: input, shape index: {}]
  %s5 = inlined_call_operand.vmem [shape: f32[1,128], index: 5, kind: input, shape index: {}]
  %s6 = inlined_call_operand.hbm [shape: f32[16,128], index: 6, kind: output, shape index: {}]
  %s7 = sld [smem:[#allocation0]]
  $region61: #{tpu_custom_call.1} parent=0
    _
  %s9 = ssub.s32 1, %s7
  %s10 = scalar_select 0, %s9, %s7
  $region1: #{tpu_custom_call.1} parent=0
    #allocation2 [shape = 'u8[65536]{0}', space=vmem, size = 0x10000, scoped, tag = 'input window, operand 2, single buffered']
    #allocation3 [shape = 's32[2]{0}', space=sflag, size = 0x8, scoped, tag = 'scoped memory for tpu_custom_call.1']
    #allocation4 [shape = 's32[2]{0}', space=sflag, size = 0x8, scoped, tag = 'scoped memory for tpu_custom_call.1']
    #allocation5 [shape = 'u8[8192]{0}', space=vmem, size = 0x2000, scoped, tag = 'output window, operand 0']
    %11 = vsyncpa [#allocation3], 0
    %12 = vsyncpa [#allocation4], 0
    %s13 = scalar_lea.sflag [#allocation4], 1
    %14 = vsyncpa %s13, 0
    loop: start=0, step=1, limit=4
    $region2: #{tpu_custom_call.1} parent=1 // loop_pre_header
      _
    $region3: #{tpu_custom_call.1} parent=1 // loop_header
      %s16 = sphi 0, %s20
      %p17 = scmp.ge.s32.totalorder %s16, 4
      %s26 = sphi 0, %s28
      %s29 = sphi 0, %s26
      %s30 = sphi 0, %s29
      %s46 = sphi 0, %s30
      %s52 = sphi 0, %s54
      %s55 = sphi 0, %s52
      %s56 = sphi 0, %s55
      %s72 = sphi 0, %s56
      %s76 = sphi 0, %s76
      %s78 = sphi 0, %s76
      %s79 = sphi 0, %s78
      %s93 = sphi 0, %s79
      %s97 = sphi 0, %s97
      %s99 = sphi 0, %s97
      %s100 = sphi 0, %s99
      %s114 = sphi 0, %s100
      %s118 = sphi 0, %s118
      %s120 = sphi 0, %s118
      %s121 = sphi 0, %s120
      %s135 = sphi 0, %s121
      %s139 = sphi 0, %s139
      %s141 = sphi 0, %s139
      %s142 = sphi 0, %s141
      %s156 = sphi 0, %s142
      %s162 = sphi 0, %s164
      %s165 = sphi 0, %s162
      %s166 = sphi 0, %s165
      %s182 = sphi 0, %s166
    $region4: #{tpu_custom_call.1} parent=1 // loop_header_branch
      %19 = sbr.rel (%p17) target = $region8
    $region5: #{tpu_custom_call.1} parent=1 // loop_body
      %s21 = ssub.s32 %s16, 1
      %s22 = ssub.s32 %s16, 2
      %s23 = sadd.s32 %s16, 1
      %s24 = ssub.s32 %s16, %s23
      %p25 = scmp.eq.s32.totalorder %s24, 0
      %s27 = sadd.s32 %s26, 1
      %s28 = scalar_select %p25, %s26, %s27
      %p31 = pneg %p25
      %p32 = scmp.eq.s32.totalorder %s16, 1
      %p33 = por %p31, %p32
      %p34 = scmp.ne.s32.totalorder %s26, %s29
      %p35 = scmp.eq.s32.totalorder %s16, 0
      %p36 = por %p34, %p35
      %p37 = scmp.ne.s32.totalorder %s26, %s29
      %p38 = scmp.eq.s32.totalorder %s21, 1
      %p39 = por %p37, %p38
      %p40 = scmp.ne.s32.totalorder %s29, %s30
      %p41 = scmp.eq.s32.totalorder %s21, 0
      %p42 = por %p40, %p41
      %p43 = scmp.ne.s32.totalorder %s29, %s30
      %p44 = scmp.eq.s32.totalorder %s22, 1
      %p45 = por %p43, %p44
      %p47 = scmp.ne.s32.totalorder %s30, %s46
      %p48 = scmp.eq.s32.totalorder %s22, 0
      %p49 = por %p47, %p48
      %s50 = ssub.s32 %s16, %s23
      %p51 = scmp.eq.s32.totalorder %s50, 0
      %s53 = sadd.s32 %s52, 1
      %s54 = scalar_select %p51, %s52, %s53
      %p57 = pneg %p51
      %p58 = scmp.eq.s32.totalorder %s16, 1
      %p59 = por %p57, %p58
      %p60 = scmp.ne.s32.totalorder %s52, %s55
      %p61 = scmp.eq.s32.totalorder %s16, 0
      %p62 = por %p60, %p61
      %p63 = scmp.ne.s32.totalorder %s52, %s55
      %p64 = scmp.eq.s32.totalorder %s21, 1
      %p65 = por %p63, %p64
      %p66 = scmp.ne.s32.totalorder %s55, %s56
      %p67 = scmp.eq.s32.totalorder %s21, 0
      %p68 = por %p66, %p67
      %p69 = scmp.ne.s32.totalorder %s55, %s56
      %p70 = scmp.eq.s32.totalorder %s22, 1
      %p71 = por %p69, %p70
      %p73 = scmp.ne.s32.totalorder %s56, %s72
      %p74 = scmp.eq.s32.totalorder %s22, 0
      %p75 = por %p73, %p74
      %s77 = sadd.s32 %s76, 1
      %p80 = scmp.eq.s32.totalorder %s16, 1
      %p81 = scmp.ne.s32.totalorder %s76, %s78
      %p82 = scmp.eq.s32.totalorder %s16, 0
      %p83 = por %p81, %p82
      %p84 = scmp.ne.s32.totalorder %s76, %s78
      %p85 = scmp.eq.s32.totalorder %s21, 1
      %p86 = por %p84, %p85
      %p87 = scmp.ne.s32.totalorder %s78, %s79
      %p88 = scmp.eq.s32.totalorder %s21, 0
      %p89 = por %p87, %p88
      %p90 = scmp.ne.s32.totalorder %s78, %s79
      %p91 = scmp.eq.s32.totalorder %s22, 1
      %p92 = por %p90, %p91
      %p94 = scmp.ne.s32.totalorder %s79, %s93
      %p95 = scmp.eq.s32.totalorder %s22, 0
      %p96 = por %p94, %p95
      %s98 = sadd.s32 %s97, 1
      %p101 = scmp.eq.s32.totalorder %s16, 1
      %p102 = scmp.ne.s32.totalorder %s97, %s99
      %p103 = scmp.eq.s32.totalorder %s16, 0
      %p104 = por %p102, %p103
      %p105 = scmp.ne.s32.totalorder %s97, %s99
      %p106 = scmp.eq.s32.totalorder %s21, 1
      %p107 = por %p105, %p106
      %p108 = scmp.ne.s32.totalorder %s99, %s100
      %p109 = scmp.eq.s32.totalorder %s21, 0
      %p110 = por %p108, %p109
      %p111 = scmp.ne.s32.totalorder %s99, %s100
      %p112 = scmp.eq.s32.totalorder %s22, 1
      %p113 = por %p111, %p112
      %p115 = scmp.ne.s32.totalorder %s100, %s114
      %p116 = scmp.eq.s32.totalorder %s22, 0
      %p117 = por %p115, %p116
      %s119 = sadd.s32 %s118, 1
      %p122 = scmp.eq.s32.totalorder %s16, 1
      %p123 = scmp.ne.s32.totalorder %s118, %s120
      %p124 = scmp.eq.s32.totalorder %s16, 0
      %p125 = por %p123, %p124
      %p126 = scmp.ne.s32.totalorder %s118, %s120
      %p127 = scmp.eq.s32.totalorder %s21, 1
      %p128 = por %p126, %p127
      %p129 = scmp.ne.s32.totalorder %s120, %s121
      %p130 = scmp.eq.s32.totalorder %s21, 0
      %p131 = por %p129, %p130
      %p132 = scmp.ne.s32.totalorder %s120, %s121
      %p133 = scmp.eq.s32.totalorder %s22, 1
      %p134 = por %p132, %p133
      %p136 = scmp.ne.s32.totalorder %s121, %s135
      %p137 = scmp.eq.s32.totalorder %s22, 0
      %p138 = por %p136, %p137
      %s140 = sadd.s32 %s139, 1
      %p143 = scmp.eq.s32.totalorder %s16, 1
      %p144 = scmp.ne.s32.totalorder %s139, %s141
      %p145 = scmp.eq.s32.totalorder %s16, 0
      %p146 = por %p144, %p145
      %p147 = scmp.ne.s32.totalorder %s139, %s141
      %p148 = scmp.eq.s32.totalorder %s21, 1
      %p149 = por %p147, %p148
      %p150 = scmp.ne.s32.totalorder %s141, %s142
      %p151 = scmp.eq.s32.totalorder %s21, 0
      %p152 = por %p150, %p151
      %p153 = scmp.ne.s32.totalorder %s141, %s142
      %p154 = scmp.eq.s32.totalorder %s22, 1
      %p155 = por %p153, %p154
      %p157 = scmp.ne.s32.totalorder %s142, %s156
      %p158 = scmp.eq.s32.totalorder %s22, 0
      %p159 = por %p157, %p158
      %s160 = ssub.s32 %s16, %s23
      %p161 = scmp.eq.s32.totalorder %s160, 0
      %s163 = sadd.s32 %s162, 1
      %s164 = scalar_select %p161, %s162, %s163
      %p167 = pneg %p161
      %p168 = scmp.eq.s32.totalorder %s16, 1
      %p169 = por %p167, %p168
      %p170 = scmp.ne.s32.totalorder %s162, %s165
      %p171 = scmp.eq.s32.totalorder %s16, 0
      %p172 = por %p170, %p171
      %p173 = scmp.ne.s32.totalorder %s162, %s165
      %p174 = scmp.eq.s32.totalorder %s21, 1
      %p175 = por %p173, %p174
      %p176 = scmp.ne.s32.totalorder %s165, %s166
      %p177 = scmp.eq.s32.totalorder %s21, 0
      %p178 = por %p176, %p177
      %p179 = scmp.ne.s32.totalorder %s165, %s166
      %p180 = scmp.eq.s32.totalorder %s22, 1
      %p181 = por %p179, %p180
      %p183 = scmp.ne.s32.totalorder %s166, %s182
      %p184 = scmp.eq.s32.totalorder %s22, 0
      %p185 = por %p183, %p184
      %p186 = scmp.le.s32.totalorder 1, %s16
      %p187 = scmp.lt.s32.totalorder %s16, 3
      %p188 = pnand %p186, %p187
      %p189 = pneg %p188
      // Predicated region
      $region9: #{tpu_custom_call.1} parent=5 // pred_check
        _
      $region10: #{tpu_custom_call.1} parent=5 // pred_check_branch
        %191 = sbr.rel (%p188) target = $region12
      $region11: #{tpu_custom_call.1} parent=5 // pred_region
        %s192 = ssub.s32 %s16, 1
        // Predicated region
        $region13: #{tpu_custom_call.1} parent=11 // pred_check
          %p193 = pneg %p89
        $region14: #{tpu_custom_call.1} parent=11 // pred_check_branch
          %195 = sbr.rel (%p193) target = $region16
        $region15: #{tpu_custom_call.1} parent=11 // pred_region
          %s197 = ssub.s32 2048, 2048
          %198 = vsyncadd [#allocation3], %s197
          %s199 = sshll.u32 [#allocation2], 4
          %s200 = int_to_ptr.vmem [resolvable:$true] %s199
          %205 = dma.hbm_to_vmem [thread:$0]  %s2, 2048, %s200, [#allocation3], 64, 64, 4
        $region16: #{tpu_custom_call.1} parent=11 // pred_fallthru
          _
        // Predicated region
        $region17: #{tpu_custom_call.1} parent=11 // pred_check
          %p206 = pneg %p110
        $region18: #{tpu_custom_call.1} parent=11 // pred_check_branch
          %208 = sbr.rel (%p206) target = $region20
        $region19: #{tpu_custom_call.1} parent=11 // pred_region
          _
        $region20: #{tpu_custom_call.1} parent=11 // pred_fallthru
          _
        // Predicated region
        $region21: #{tpu_custom_call.1} parent=11 // pred_check
          %p209 = pneg %p131
        $region22: #{tpu_custom_call.1} parent=11 // pred_check_branch
          %211 = sbr.rel (%p209) target = $region24
        $region23: #{tpu_custom_call.1} parent=11 // pred_region
          _
        $region24: #{tpu_custom_call.1} parent=11 // pred_fallthru
          _
        // Predicated region
        $region25: #{tpu_custom_call.1} parent=11 // pred_check
          %p212 = pneg %p152
        $region26: #{tpu_custom_call.1} parent=11 // pred_check_branch
          %214 = sbr.rel (%p212) target = $region28
        $region27: #{tpu_custom_call.1} parent=11 // pred_region
          _
        $region28: #{tpu_custom_call.1} parent=11 // pred_fallthru
          _
      $region12: #{tpu_custom_call.1} parent=5 // pred_fallthru
        _
      %p215 = scmp.lt.s32.totalorder %s16, 2
      // Predicated region
      $region29: #{tpu_custom_call.1} parent=5 // pred_check
        %p216 = pneg %p215
      $region30: #{tpu_custom_call.1} parent=5 // pred_check_branch
        %218 = sbr.rel (%p216) target = $region32
      $region31: #{tpu_custom_call.1} parent=5 // pred_region
        // Predicated region
        $region33: #{tpu_custom_call.1} parent=31 // pred_check
          %p219 = pneg %p36
        $region34: #{tpu_custom_call.1} parent=31 // pred_check_branch
          %221 = sbr.rel (%p219) target = $region36
        $region35: #{tpu_custom_call.1} parent=31 // pred_region
          %p222 = scmp.lt.s32.totalorder %s16, 1
          %s223 = scalar_select %p222, %s16, 1
          %s224 = smul.addr %s223, 8
          %s225 = scalar_lea.vmem %s0, %s224
        $region36: #{tpu_custom_call.1} parent=31 // pred_fallthru
          _
        // Predicated region
        $region37: #{tpu_custom_call.1} parent=31 // pred_check
          %p226 = pneg %p62
        $region38: #{tpu_custom_call.1} parent=31 // pred_check_branch
          %228 = sbr.rel (%p226) target = $region40
        $region39: #{tpu_custom_call.1} parent=31 // pred_region
          %p229 = scmp.lt.s32.totalorder %s16, 1
          %s230 = scalar_select %p229, %s16, 1
          %s231 = smul.addr %s230, 8
          %s232 = scalar_lea.vmem %s1, %s231
        $region40: #{tpu_custom_call.1} parent=31 // pred_fallthru
          _
      $region32: #{tpu_custom_call.1} parent=5 // pred_fallthru
        _
      %p233 = scmp.le.s32.totalorder 1, %s16
      %p234 = scmp.lt.s32.totalorder %s16, 3
      %p235 = pnand %p233, %p234
      %p236 = pneg %p235
      // Predicated region
      $region41: #{tpu_custom_call.1} parent=5 // pred_check
        _
      $region42: #{tpu_custom_call.1} parent=5 // pred_check_branch
        %238 = sbr.rel (%p235) target = $region44
      $region43: #{tpu_custom_call.1} parent=5 // pred_region
        %s239 = ssub.s32 %s16, 1
        // Predicated region
        $region45: #{tpu_custom_call.1} parent=43 // pred_check
          %p240 = pneg %p89
        $region46: #{tpu_custom_call.1} parent=43 // pred_check_branch
          %242 = sbr.rel (%p240) target = $region48
        $region47: #{tpu_custom_call.1} parent=43 // pred_region
          %243 = dma.done [#allocation3], 2048
        $region48: #{tpu_custom_call.1} parent=43 // pred_fallthru
          _
        %p244 = scmp.lt.s32.totalorder %s21, 1
        %s245 = scalar_select %p244, %s21, 1
        %s246 = smul.addr %s245, 8
        %s247 = scalar_lea.vmem %s0, %s246
        %p248 = pneg %p42
        %p249 = pneg %p39
        %p250 = scmp.lt.s32.totalorder %s21, 1
        %s251 = scalar_select %p250, %s21, 1
        %s252 = smul.addr %s251, 8
        %s253 = scalar_lea.vmem %s1, %s252
        %p254 = pneg %p68
        %p255 = pneg %p65
        %p256 = pneg %p89
        %p257 = pneg %p86
        %p258 = pneg %p110
        %p259 = pneg %p107
        %p260 = pneg %p131
        %p261 = pneg %p128
        %p262 = pneg %p152
        %p263 = pneg %p149
        %p264 = pneg %p178
        %p265 = pneg %p175
        %s266 = sand.u32 %s165, 1
        %s267 = scalar_lea.sflag [#allocation4], %s266
        %s268 = sand.u32 %s165, 1
        %s269 = smul.addr %s268, 8
        %s270 = scalar_lea.vmem [#allocation5], %s269
        %p271 = scmp.lt.s32.totalorder %s21, 1
        %s272 = scalar_select %p271, %s21, 1
        %s273 = smul.addr %s272, 8
        %s274 = scalar_lea.vmem %s0, %s273
        %p275 = scmp.lt.s32.totalorder %s21, 1
        %s276 = scalar_select %p275, %s21, 1
        %s277 = smul.addr %s276, 8
        %s278 = scalar_lea.vmem %s1, %s277
        %v280 = vld [vmem:[%s274] sm:$0xff]
        %v281 = vlaneseq
        %v282 = vand.u32 %v281, 127
        %v283 = vadd.s32 %v282, 128
        %284 = vset.pattern.permute.xlu0 0
        %285 = vperm.xlu0 %284, %v280
        %v286 = vpop.permute.xlu0 %285
        %vm287 = vcmp.eq.s32.totalorder %v282, %v286
        %vm288 = vcmp.eq.s32.totalorder %v283, %v286
        %v289 = vsel %vm287, 1, 0
        %v290 = vsel %vm288, 1, 0
        %v291 = vcvt.s32.f32 %v289
        %v292 = vcvt.s32.f32 %v290
        %v293 = vpack.c.bf16 %v291, %v291
        %v294 = vpack.c.bf16 %v292, %v292
        %v295 = vld [vmem:[#allocation2] sm:$0xf]
        %v296 = vld [vmem:[#allocation2 + $0x4] sm:$0xf]
        %v297 = vld [vmem:[#allocation2 + $0x8] sm:$0xf]
        %v298 = vld [vmem:[#allocation2 + $0xc] sm:$0xf]
        %v299 = vld [vmem:[#allocation2 + $0x10] sm:$0xf]
        %v300 = vld [vmem:[#allocation2 + $0x14] sm:$0xf]
        %v301 = vld [vmem:[#allocation2 + $0x18] sm:$0xf]
        %v302 = vld [vmem:[#allocation2 + $0x1c] sm:$0xf]
        %v303 = vld [vmem:[#allocation2 + $0x20] sm:$0xf]
        %v304 = vld [vmem:[#allocation2 + $0x24] sm:$0xf]
        %v305 = vld [vmem:[#allocation2 + $0x28] sm:$0xf]
        %v306 = vld [vmem:[#allocation2 + $0x2c] sm:$0xf]
        %v307 = vld [vmem:[#allocation2 + $0x30] sm:$0xf]
        %v308 = vld [vmem:[#allocation2 + $0x34] sm:$0xf]
        %v309 = vld [vmem:[#allocation2 + $0x38] sm:$0xf]
        %v310 = vld [vmem:[#allocation2 + $0x3c] sm:$0xf]
        %v311 = vld [vmem:[#allocation2 + $0x40] sm:$0xf]
        %v312 = vld [vmem:[#allocation2 + $0x44] sm:$0xf]
        %v313 = vld [vmem:[#allocation2 + $0x48] sm:$0xf]
        %v314 = vld [vmem:[#allocation2 + $0x4c] sm:$0xf]
        %v315 = vld [vmem:[#allocation2 + $0x50] sm:$0xf]
        %v316 = vld [vmem:[#allocation2 + $0x54] sm:$0xf]
        %v317 = vld [vmem:[#allocation2 + $0x58] sm:$0xf]
        %v318 = vld [vmem:[#allocation2 + $0x5c] sm:$0xf]
        %v319 = vld [vmem:[#allocation2 + $0x60] sm:$0xf]
        %v320 = vld [vmem:[#allocation2 + $0x64] sm:$0xf]
        %v321 = vld [vmem:[#allocation2 + $0x68] sm:$0xf]
        %v322 = vld [vmem:[#allocation2 + $0x6c] sm:$0xf]
        %v323 = vld [vmem:[#allocation2 + $0x70] sm:$0xf]
        %v324 = vld [vmem:[#allocation2 + $0x74] sm:$0xf]
        %v325 = vld [vmem:[#allocation2 + $0x78] sm:$0xf]
        %v326 = vld [vmem:[#allocation2 + $0x7c] sm:$0xf]
        %v327 = vld [vmem:[%s278] sm:$0xff]
        %v328 = vld [vmem:[%s3] sm:$0x1]
        %v329 = vlaneseq
        %v330 = vshrl.u32 %v329, 7
        %v331 = vsub.s32 0, %v330
        %v332 = vrot.slane %v328, %v331
        %vm333 = vcmp.eq.s32.totalorder %v327, 1
        %v334 = vld [vmem:[%s3 + $0x1] sm:$0x1]
        %v335 = vsel %vm333, 1, 0
        %336 = vset.pattern.permute.xlu0 0
        %337 = vperm.xlu0 %336, %v335
        %v338 = vpop.permute.xlu0 %337
        %vm339 = vcmp.eq.s32.totalorder %v338, 1
        %v340 = vlaneseq
        %v341 = vshrl.u32 %v340, 7
        %v342 = vsub.s32 0, %v341
        %v343 = vrot.slane %v334, %v342
        %v344 = vsel %vm339, %v343, %v332
        %v377 = vunpack.c.l.b16 %v295
        %v378 = vunpack.c.l.b16 %v296
        %v379 = vunpack.c.l.b16 %v297
        %v380 = vunpack.c.l.b16 %v298
        %v381 = vunpack.c.l.b16 %v299
        %v382 = vunpack.c.l.b16 %v300
        %v383 = vunpack.c.l.b16 %v301
        %v384 = vunpack.c.l.b16 %v302
        %v385 = vunpack.c.l.b16 %v303
        %v386 = vunpack.c.l.b16 %v304
        %v387 = vunpack.c.l.b16 %v305
        %v388 = vunpack.c.l.b16 %v306
        %v389 = vunpack.c.l.b16 %v307
        %v390 = vunpack.c.l.b16 %v308
        %v391 = vunpack.c.l.b16 %v309
        %v392 = vunpack.c.l.b16 %v310
        %v393 = vunpack.c.l.b16 %v311
        %v394 = vunpack.c.l.b16 %v312
        %v395 = vunpack.c.l.b16 %v313
        %v396 = vunpack.c.l.b16 %v314
        %v397 = vunpack.c.l.b16 %v315
        %v398 = vunpack.c.l.b16 %v316
        %v399 = vunpack.c.l.b16 %v317
        %v400 = vunpack.c.l.b16 %v318
        %v401 = vunpack.c.l.b16 %v319
        %v402 = vunpack.c.l.b16 %v320
        %v403 = vunpack.c.l.b16 %v321
        %v404 = vunpack.c.l.b16 %v322
        %v405 = vunpack.c.l.b16 %v323
        %v406 = vunpack.c.l.b16 %v324
        %v407 = vunpack.c.l.b16 %v325
        %v408 = vunpack.c.l.b16 %v326
        %v409 = vpack.c.b16 %v378, %v377
        %v410 = vpack.c.b16 %v380, %v379
        %v411 = vpack.c.b16 %v382, %v381
        %v412 = vpack.c.b16 %v384, %v383
        %v413 = vpack.c.b16 %v386, %v385
        %v414 = vpack.c.b16 %v388, %v387
        %v415 = vpack.c.b16 %v390, %v389
        %v416 = vpack.c.b16 %v392, %v391
        %v417 = vpack.c.b16 %v394, %v393
        %v418 = vpack.c.b16 %v396, %v395
        %v419 = vpack.c.b16 %v398, %v397
        %v420 = vpack.c.b16 %v400, %v399
        %v421 = vpack.c.b16 %v402, %v401
        %v422 = vpack.c.b16 %v404, %v403
        %v423 = vpack.c.b16 %v406, %v405
        %v424 = vpack.c.b16 %v408, %v407
        %441 = vmatprep.subr.bf16.mxu0 0
        %442 = vmatpush1.bf16.msra.mxu0 %v416
        %443 = vmatprep.subr.bf16.mxu0 0
        %444 = vmatpush1.bf16.msra.mxu0 %v415
        %445 = vmatprep.subr.bf16.mxu0 0
        %446 = vmatpush1.bf16.msra.mxu0 %v414
        %447 = vmatprep.subr.bf16.mxu0 0
        %448 = vmatpush1.bf16.msra.mxu0 %v413
        %449 = vmatprep.subr.bf16.mxu0 0
        %450 = vmatpush1.bf16.msra.mxu0 %v412
        %451 = vmatprep.subr.bf16.mxu0 0
        %452 = vmatpush1.bf16.msra.mxu0 %v411
        %453 = vmatprep.subr.bf16.mxu0 0
        %454 = vmatpush1.bf16.msra.mxu0 %v410
        %455 = vmatprep.subr.bf16.mxu0 0
        %456 = vmatpush1.bf16.msra.mxu0 %v409
        %457 = vmatprep.subr.bf16.mxu0 0
        %458 = vmatpush2.bf16.msra.mxu0 %v424
        %459 = vmatprep.subr.bf16.mxu0 0
        %460 = vmatpush2.bf16.msra.mxu0 %v423
        %461 = vmatprep.subr.bf16.mxu0 0
        %462 = vmatpush2.bf16.msra.mxu0 %v422
        %463 = vmatprep.subr.bf16.mxu0 0
        %464 = vmatpush2.bf16.msra.mxu0 %v421
        %465 = vmatprep.subr.bf16.mxu0 0
        %466 = vmatpush2.bf16.msra.mxu0 %v420
        %467 = vmatprep.subr.bf16.mxu0 0
        %468 = vmatpush2.bf16.msra.mxu0 %v419
        %469 = vmatprep.subr.bf16.mxu0 0
        %470 = vmatpush2.bf16.msra.mxu0 %v418
        %471 = vmatprep.subr.bf16.mxu0 0
        %472 = vmatpush2.bf16.msra.mxu0 %v417
        %473 = vmatprep.mubr.bf16.mxu0 %v294
        %474 = vmatmul.mubr.bf16.gmra.mxu0 %v293
        %v475 = vpop.f32.mrf.mxu0
        %v476 = vadd.f32 %v344, %v475
        %v477 = vpop.f32.mrf.mxu0
        %v478 = vpop.f32.mrf.mxu0
        %v479 = vpop.f32.mrf.mxu0
        %480 = vdwg.mxu0
        %v481 = vld [vmem:[%s4] sm:$0x1]
        %v482 = vld [vmem:[%s5] sm:$0x1]
        %483 = vadd.xlane.f32.xlu0 %v476
        %v484 = vpop.xlane.xlu0 %483
        %v485 = vmul.f32 %v484, 0.03125
        %v486 = vsub.f32 %v476, %v485
        %vm487 = vcmp.lt.s32.totalorder %v282, 32
        %v488 = vsel %vm487, %v486, 0.0
        %v489 = vmul.f32 %v488, %v488
        %490 = vadd.xlane.f32.xlu0 %v489
        %v491 = vpop.xlane.xlu0 %490
        %v492 = vmul.f32 %v491, 0.03125
        %v493 = vadd.f32 %v492, 1e-05
        %v494 = vrsqrt.pop %v493
        %v495 = vmul.f32 %v488, %v494
        %v497 = vlaneseq
        %v498 = vshrl.u32 %v497, 7
        %v499 = vsub.s32 0, %v498
        %v500 = vrot.slane %v481, %v499
        %v502 = vmul.f32 %v495, %v500
        %v504 = vlaneseq
        %v505 = vshrl.u32 %v504, 7
        %v506 = vsub.s32 0, %v505
        %v507 = vrot.slane %v482, %v506
        %v509 = vadd.f32 %v502, %v507
        %510 = vst [vmem:[%s270] sm:$0xff] %v509
        %s511 = sand.u32 %s165, 1
        %s512 = scalar_lea.sflag [#allocation4], %s511
        %s513 = sand.u32 %s165, 1
        %s514 = smul.addr %s513, 8
        %s515 = scalar_lea.vmem [#allocation5], %s514
        // Predicated region
        $region49: #{tpu_custom_call.1} parent=43 // pred_check
          %p516 = pneg %p175
        $region50: #{tpu_custom_call.1} parent=43 // pred_check_branch
          %518 = sbr.rel (%p516) target = $region52
        $region51: #{tpu_custom_call.1} parent=43 // pred_region
          %s520 = ssub.s32 128, 128
          %521 = vsyncadd %s512, %s520
          %s522 = smul.addr %s21, 128
          %s523 = scalar_lea.hbm %s6, %s522
          %s525 = sshll.u32 %s515, 4
          %s526 = int_to_ptr.vmem [resolvable:$true] %s525
          %528 = dma.vmem_to_hbm [thread:$0]  %s526, 128, %s523, %s512
        $region52: #{tpu_custom_call.1} parent=43 // pred_fallthru
          _
      $region44: #{tpu_custom_call.1} parent=5 // pred_fallthru
        _
      %p529 = scmp.le.s32.totalorder 2, %s16
      // Predicated region
      $region53: #{tpu_custom_call.1} parent=5 // pred_check
        %p530 = pneg %p529
      $region54: #{tpu_custom_call.1} parent=5 // pred_check_branch
        %532 = sbr.rel (%p530) target = $region56
      $region55: #{tpu_custom_call.1} parent=5 // pred_region
        %s533 = ssub.s32 %s16, 2
        // Predicated region
        $region57: #{tpu_custom_call.1} parent=55 // pred_check
          %p534 = pneg %p181
        $region58: #{tpu_custom_call.1} parent=55 // pred_check_branch
          %536 = sbr.rel (%p534) target = $region60
        $region59: #{tpu_custom_call.1} parent=55 // pred_region
          %s537 = sand.u32 %s166, 1
          %s538 = scalar_lea.sflag [#allocation4], %s537
          %s539 = sand.u32 %s166, 1
          %s540 = smul.addr %s539, 8
          %s541 = scalar_lea.vmem [#allocation5], %s540
          %542 = dma.done %s538, 128
        $region60: #{tpu_custom_call.1} parent=55 // pred_fallthru
          _
      $region56: #{tpu_custom_call.1} parent=5 // pred_fallthru
        _
    $region6: #{tpu_custom_call.1} parent=1 // loop_footer
      %s20 = sadd.s32 1, %s16
    $region7: #{tpu_custom_call.1} parent=1 // loop_footer_branch
      %15 = sbr.rel target = $region3
    $region8: #{tpu_custom_call.1} parent=1 // loop_exit
      _
    %543 = vsyncpa [#allocation3], 1
    %s544 = scalar_lea.sflag [#allocation3], 1
    %545 = vsyncpa %s544, 1
    %546 = vsyncpa [#allocation4], 1
    %s547 = scalar_lea.sflag [#allocation4], 1
    %548 = vsyncpa %s547, 1

</llo_original>
